<compile_context>
chip_gen: v5e
topology: v5e:2x2
jax: 0.10.0
libtpu: 0.0.40
codegen_flags: <defaults>
</compile_context>

<pallas_src>
import functools

import numpy as np
import jax
import jax.numpy as jnp
from jax import lax
from jax.experimental import pallas as pl
from jax.experimental.pallas import tpu as pltpu


# --------------------------------------------------------------------------
# helpers
# --------------------------------------------------------------------------
def _pick_tile(total, target, align):
    """Largest divisor of `total` that is <= target and a multiple of `align`.

    Falls back to `total` (full dimension) when no such divisor exists, which
    is always a legal block size.
    """
    for cand in range(min(int(target), int(total)), 0, -1):
        if total % cand == 0 and cand % align == 0:
            return cand
    return int(total)


# --------------------------------------------------------------------------
# grayscale kernel (tiled, memory bound)
# --------------------------------------------------------------------------
def _grayscale_kernel(img_ref, out_ref):
    # img_ref: (B, 3, TILE_N) f32 ; out_ref: (B, 1, TILE_N) f32
    r = img_ref[:, 0:1, :]
    g = img_ref[:, 1:2, :]
    b = img_ref[:, 2:3, :]
    out_ref[...] = 0.299 * r + 0.587 * g + 0.114 * b


def rgb_to_grayscale(image):
    B, C, H, W = image.shape
    assert C == 3
    N = H * W
    TILE_N = _pick_tile(N, 8 * 1024, 128)   # lane-dense blocks, pipelined
    img_flat = image.reshape(B, C, N).astype(jnp.float32)
    out = pl.pallas_call(
        _grayscale_kernel,
        out_shape=jax.ShapeDtypeStruct((B, 1, N), jnp.float32),
        grid=(N // TILE_N,),
        in_specs=[pl.BlockSpec((B, C, TILE_N), lambda n: (0, 0, n))],
        out_specs=pl.BlockSpec((B, 1, TILE_N), lambda n: (0, 0, n)),
        compiler_params=pltpu.CompilerParams(dimension_semantics=("parallel",)),
    )(img_flat)
    return out.reshape(B, 1, H, W)


# --------------------------------------------------------------------------
# warp + blend kernel
# --------------------------------------------------------------------------
def _warp_blend_kernel(hinv_ref, wlim_ref, right_ref, dst_ref, dmask_ref,
                       out_img_ref, out_mask_ref, acc_ref, *, src_h, src_w):
    f32 = jnp.float32
    i = pl.program_id(0)     # destination row tile       (parallel)
    j = pl.program_id(1)     # destination column tile    (parallel)
    kr = pl.program_id(2)    # source row tile            (reduction)
    kc = pl.program_id(3)    # source column tile         (reduction)
    nkr = pl.num_programs(2)
    nkc = pl.num_programs(3)

    bc, tile_h, tile_w = dst_ref.shape
    _, tile_qr, tile_qc = right_ref.shape
    tile_p = tile_h * tile_w

    # ---- init the accumulator at the start of the (kr, kc) reduction
    @pl.when((kr == 0) & (kc == 0))
    def _():
        acc_ref[...] = jnp.zeros_like(acc_ref)

    # ---- inverse-map destination pixels of this (i, j) tile to source coords
    h00 = hinv_ref[0]; h01 = hinv_ref[1]; h02 = hinv_ref[2]
    h10 = hinv_ref[3]; h11 = hinv_ref[4]; h12 = hinv_ref[5]
    h20 = hinv_ref[6]; h21 = hinv_ref[7]; h22 = hinv_ref[8]

    p_idx = lax.broadcasted_iota(jnp.int32, (1, tile_p), 1)   # O(tile_p) only
    x_d = (j * tile_w + p_idx % tile_w).astype(f32)
    y_d = (i * tile_h + p_idx // tile_w).astype(f32)

    xw = h00 * x_d + h01 * y_d + h02
    yw = h10 * x_d + h11 * y_d + h12
    zw = h20 * x_d + h21 * y_d + h22
    # eps-guard the projective divide; reciprocal runs on the (idle) EUP slot.
    zs = jnp.where(zw >= 0.0, jnp.maximum(zw, 1e-8), jnp.minimum(zw, -1e-8))
    inv_z = pl.reciprocal(zs, approx=True)
    sx = xw * inv_z
    sy = yw * inv_z

    x0 = jnp.floor(sx)
    y0 = jnp.floor(sy)
    wx = sx - x0
    wy = sy - y0

    # ---- footprint skip: only destination-column tiles inside
    #      [wlim[0], wlim[1]] can receive warped right-image pixels.
    tile_active = (j >= wlim_ref[0]) & (j <= wlim_ref[1])

    @pl.when(tile_active)
    def _():
        # Factored bilinear weights: wt[(r, c), p] = wqy[r, p] * wqx[c, p].
        # Row/column index vectors are O(tile_q), not O(tile_q * tile_p).
        r_abs = (kr * tile_qr
                 + lax.broadcasted_iota(jnp.int32, (tile_qr, 1), 0)).astype(f32)
        c_abs = (kc * tile_qc
                 + lax.broadcasted_iota(jnp.int32, (tile_qc, 1), 0)).astype(f32)
        wqy = (jnp.where(r_abs == y0, 1.0 - wy, 0.0)
               + jnp.where(r_abs == y0 + 1.0, wy, 0.0))      # (tile_qr, tile_p)
        wqx = (jnp.where(c_abs == x0, 1.0 - wx, 0.0)
               + jnp.where(c_abs == x0 + 1.0, wx, 0.0))      # (tile_qc, tile_p)

        right_bf = right_ref[...].astype(jnp.bfloat16)       # (bc, tile_qr, tile_qc)
        acc = acc_ref[...]
        # Static unroll over the few source rows of this tile; each step is a
        # 2D (bc, tile_qc) @ (tile_qc, tile_p) bf16 MXU matmul with f32 accum.
        for r in range(tile_qr):
            w_r = (wqy[r:r + 1, :] * wqx).astype(jnp.bfloat16)   # (tile_qc, tile_p)
            acc = acc + jnp.dot(right_bf[:, r, :], w_r,
                                preferred_element_type=jnp.float32)
        acc_ref[...] = acc

    # ---- finalize: blend into the panorama on the last reduction step
    @pl.when((kr == nkr - 1) & (kc == nkc - 1))
    def _():
        # Nearest-neighbour warp of an all-ones mask == in-bounds test
        # (mask_right is always all-ones in this pipeline).
        xn = jnp.floor(sx + 0.5)
        yn = jnp.floor(sy + 0.5)
        inb = ((xn >= 0.0) & (xn <= src_w - 1.0)
               & (yn >= 0.0) & (yn <= src_h - 1.0) & tile_active)
        src_mask = inb.astype(f32)                           # (1, tile_p)

        dst = dst_ref[...].reshape(bc, tile_p)
        dmask = dmask_ref[...].reshape(bc, tile_p)
        out = jnp.where(src_mask > 0.5, acc_ref[...], dst)   # naive blending
        new_mask = ((dmask + src_mask) > 0.0).astype(f32)
        out_img_ref[...] = out.reshape(bc, tile_h, tile_w)
        out_mask_ref[...] = new_mask.reshape(bc, tile_h, tile_w)


def warp_blend(hinv, x_lo, x_hi, images_right, dst_img, dst_mask,
               *, tile_h=8, tile_w=128, tile_qrows=8, tile_qcols=128):
    """Warp the right image into the panorama frame and blend with dst."""
    B, C, H, W_R = images_right.shape
    W_out = dst_img.shape[-1]
    BC = B * C

    TILE_H = _pick_tile(H, tile_h, 8)
    TILE_W = _pick_tile(W_out, tile_w, 128)
    TILE_QR = _pick_tile(H, tile_qrows, 8)
    TILE_QC = _pick_tile(W_R, tile_qcols, 128)
    ni, nj = H // TILE_H, W_out // TILE_W
    nkr, nkc = H // TILE_QR, W_R // TILE_QC

    # Destination-column-tile footprint of the warped right image (host-side).
    if np.isfinite(x_lo) and np.isfinite(x_hi):
        j_lo = int(np.clip(np.floor(x_lo / TILE_W), 0, nj - 1))
        j_hi = int(np.clip(np.floor(x_hi / TILE_W), -1, nj - 1))
    else:
        j_lo, j_hi = 0, nj - 1
    wlim = jnp.asarray([j_lo, j_hi], jnp.int32)

    hinv_flat = jnp.asarray(hinv, jnp.float32).reshape(9)
    right = images_right.reshape(BC, H, W_R).astype(jnp.float32)
    dst = dst_img.reshape(BC, H, W_out).astype(jnp.float32)
    dmask = dst_mask.reshape(BC, H, W_out).astype(jnp.float32)

    kernel = functools.partial(_warp_blend_kernel, src_h=H, src_w=W_R)
    out_img, out_mask = pl.pallas_call(
        kernel,
        out_shape=(
            jax.ShapeDtypeStruct((BC, H, W_out), jnp.float32),
            jax.ShapeDtypeStruct((BC, H, W_out), jnp.float32),
        ),
        grid=(ni, nj, nkr, nkc),
        in_specs=[
            pl.BlockSpec(memory_space=pltpu.MemorySpace.SMEM),   # hinv (9,)
            pl.BlockSpec(memory_space=pltpu.MemorySpace.SMEM),   # wlim (2,)
            pl.BlockSpec((BC, TILE_QR, TILE_QC), lambda i, j, kr, kc: (0, kr, kc)),
            pl.BlockSpec((BC, TILE_H, TILE_W), lambda i, j, kr, kc: (0, i, j)),
            pl.BlockSpec((BC, TILE_H, TILE_W), lambda i, j, kr, kc: (0, i, j)),
        ],
        out_specs=(
            pl.BlockSpec((BC, TILE_H, TILE_W), lambda i, j, kr, kc: (0, i, j)),
            pl.BlockSpec((BC, TILE_H, TILE_W), lambda i, j, kr, kc: (0, i, j)),
        ),
        scratch_shapes=[pltpu.VMEM((BC, TILE_H * TILE_W), jnp.float32)],
        compiler_params=pltpu.CompilerParams(
            dimension_semantics=("parallel", "parallel", "arbitrary", "arbitrary"),
            vmem_limit_bytes=32 * 1024 * 1024,
        ),
    )(hinv_flat, wlim, right, dst, dmask)
    return (out_img.reshape(B, C, H, W_out), out_mask.reshape(B, C, H, W_out))


# --------------------------------------------------------------------------
# Host-side glue: homography estimation (tiny linear algebra) and footprint
# --------------------------------------------------------------------------
def _find_homography_dlt(points_src, points_dst):
    """Normalized DLT: returns H (3,3) with points_dst ~ H @ points_src."""
    def normalize(pts):
        mean = pts.mean(axis=0)
        d = np.sqrt(((pts - mean) ** 2).sum(axis=1)).mean()
        s = np.sqrt(2.0) / max(d, 1e-8)
        T = np.array([[s, 0.0, -s * mean[0]],
                      [0.0, s, -s * mean[1]],
                      [0.0, 0.0, 1.0]], dtype=np.float64)
        ph = np.concatenate([pts, np.ones((pts.shape[0], 1))], axis=1)
        return (T @ ph.T).T[:, :2], T

    src_n, Ts = normalize(np.asarray(points_src, np.float64))
    dst_n, Td = normalize(np.asarray(points_dst, np.float64))
    n = src_n.shape[0]
    A = np.zeros((2 * n, 9), np.float64)
    for i in range(n):
        xs, ys = src_n[i]
        xd, yd = dst_n[i]
        A[2 * i] = [xs, ys, 1, 0, 0, 0, -xd * xs, -xd * ys, -xd]
        A[2 * i + 1] = [0, 0, 0, xs, ys, 1, -yd * xs, -yd * ys, -yd]
    _, _, Vt = np.linalg.svd(A)
    Hn = Vt[-1].reshape(3, 3)
    Hm = np.linalg.inv(Td) @ Hn @ Ts
    return Hm / Hm[2, 2]


def _warp_x_bounds(homo, src_w, src_h):
    """Panorama-x extent of the warped right image (from the 4 corners)."""
    corners = np.array([[0.0, 0.0, 1.0],
                        [src_w - 1.0, 0.0, 1.0],
                        [0.0, src_h - 1.0, 1.0],
                        [src_w - 1.0, src_h - 1.0, 1.0]], np.float64).T
    p = np.asarray(homo, np.float64) @ corners
    w = p[2]
    if ((not np.all(np.isfinite(p))) or np.any(np.abs(w) < 1e-8)
            or (np.min(w) * np.max(w) < 0)):
        return -np.inf, np.inf          # degenerate: disable the footprint skip
    x = p[0] / w
    return float(x.min()) - 2.0, float(x.max()) + 2.0


# --------------------------------------------------------------------------
# ImageStitcher (Pallas/JAX)
# --------------------------------------------------------------------------
class PallasImageStitcher:
    def __init__(self, estimator="vanilla", blending_method="naive", overlap=4):
        if estimator not in ("ransac", "vanilla"):
            raise NotImplementedError(f"Unsupported estimator {estimator}.")
        if blending_method != "naive":
            raise NotImplementedError(f"Unsupported blending method {blending_method}.")
        self.estimator = estimator
        self.blending_method = blending_method
        self.overlap = overlap

    # ---------------- matcher ----------------
    def preprocess(self, image_1, image_2):
        return {"image0": rgb_to_grayscale(image_1),
                "image1": rgb_to_grayscale(image_2)}

    def on_matcher(self, data):
        # TODO(synk): LoFTR (pretrained CNN+transformer matcher) has no clean Pallas
        # equivalent without its checkpoint; emit deterministic synthetic matches
        # consistent with a fixed ground-truth homography instead.
        H_img = data["image1"].shape[-2]
        W_right = data["image1"].shape[-1]
        W_left = data["image0"].shape[-1]
        tx = float(W_left - self.overlap)
        h_gt = np.array([[1.0, 0.03, tx],
                         [0.02, 1.0, 0.5],
                         [0.001, 0.0005, 1.0]], dtype=np.float64)
        n = 12
        key = jax.random.PRNGKey(0)
        kx = jax.random.uniform(key, (n,), minval=1.0, maxval=W_right - 2.0)
        ky = jax.random.uniform(jax.random.fold_in(key, 7), (n,),
                                minval=1.0, maxval=H_img - 2.0)
        kp_right = np.stack([np.asarray(kx, np.float64),
                             np.asarray(ky, np.float64)], axis=-1)
        kp_right_h = np.concatenate([kp_right, np.ones((n, 1))], axis=-1)
        kp_left_h = (h_gt @ kp_right_h.T).T
        kp_left = kp_left_h[:, :2] / kp_left_h[:, 2:3]
        return {"keypoints0": jnp.asarray(kp_left, jnp.float32),
                "keypoints1": jnp.asarray(kp_right, jnp.float32),
                "batch_indexes": jnp.zeros((n,), jnp.int32)}

    # ---------------- homography ----------------
    def _estimate_homography(self, keypoints1, keypoints2):
        # H maps keypoints2 (right) -> keypoints1 (left / panorama frame)
        if self.estimator == "ransac":
            # TODO(synk): kornia RANSAC loop not ported; synthetic matches are
            # outlier-free so plain normalized DLT yields the same model.
            pass
        homo = _find_homography_dlt(np.asarray(keypoints2, np.float64),
                                    np.asarray(keypoints1, np.float64))
        return homo[None]

    def estimate_transform(self, **kwargs):
        kp1 = np.asarray(kwargs["keypoints0"])
        kp2 = np.asarray(kwargs["keypoints1"])
        idx = np.asarray(kwargs["batch_indexes"])
        homos = [self._estimate_homography(kp1[idx == i], kp2[idx == i])
                 for i in np.unique(idx)]
        if len(homos) == 0:
            raise RuntimeError("Compute homography failed. No matched keypoints found.")
        return np.concatenate(homos, axis=0)

    # ---------------- stitch (Pallas hot path) ----------------
    def stitch_pair(self, images_left, images_right, mask_left=None, mask_right=None):
        input_dict = self.preprocess(images_left, images_right)
        correspondences = self.on_matcher(input_dict)
        homo = self.estimate_transform(**correspondences)        # (1, 3, 3) np
        if mask_left is None:
            mask_left = jnp.ones_like(images_left)
        if mask_right is None:
            mask_right = jnp.ones_like(images_right)
        # TODO(synk): mask_right is always all-ones in forward(); the nearest-warped
        # source mask is therefore computed analytically inside the kernel
        # (in-bounds test) instead of warping a ones image.
        hinv = np.linalg.inv(homo[0])
        H_img, W_R = images_right.shape[-2], images_right.shape[-1]
        x_lo, x_hi = _warp_x_bounds(homo[0], W_R, H_img)

        dst_img = jnp.concatenate([images_left, jnp.zeros_like(images_right)], axis=-1)
        dst_mask = jnp.concatenate([mask_left, jnp.zeros_like(mask_right)], axis=-1)

        out_img, out_mask = warp_blend(hinv, x_lo, x_hi, images_right,
                                       dst_img, dst_mask)
        return out_img, out_mask

    def postprocess(self, image, mask):
        # matches reference: mask.sum((0,1)).bool().any(0).long().argmin()
        col = (jnp.sum(mask, axis=(0, 1)) > 0).any(axis=0)        # (W_total,)
        index = int(jnp.argmin(col.astype(jnp.int32)))
        if index == 0:
            return image
        return image[..., :index]

    def __call__(self, *imgs):
        img_out = imgs[0]
        mask_left = jnp.ones_like(img_out)
        for i in range(len(imgs) - 1):
            img_out, mask_left = self.stitch_pair(img_out, imgs[i + 1], mask_left)
        return self.postprocess(img_out, mask_left)


# --------------------------------------------------------------------------
if __name__ == "__main__":
    key = jax.random.PRNGKey(0)
    k1, k2 = jax.random.split(key)
    B, C, H, W = 1, 3, 16, 16
    img_left = jax.random.uniform(k1, (B, C, H, W), jnp.float32)
    img_right = jax.random.uniform(k2, (B, C, H, W), jnp.float32)

    stitcher = PallasImageStitcher(estimator="vanilla")
    out = stitcher(img_left, img_right)
    jax.block_until_ready(out)
    print("KERNEL_OK")
</pallas_src>

<mosaic_0001>
module attributes {stable_mosaic.version = 11 : i64} {
  func.func @_grayscale_kernel(%arg0: i32, %arg1: memref<1x3x256xf32, #tpu.memory_space<vmem>>, %arg2: memref<1x1x256xf32, #tpu.memory_space<vmem>>) attributes {dimension_semantics = [#tpu.dimension_semantics<parallel>], iteration_bounds = array<i64: 1>, scalar_prefetch = 0 : i64, scratch_operands = 0 : i64, tpu.core_type = #tpu.core_type<tc>, window_params = [{transform_indices = @transform_0, window_bounds = array<i64: 1, 3, 256>}, {transform_indices = @transform_1, window_bounds = array<i64: 1, 1, 256>}]} {
    %c0 = arith.constant 0 : index
    %c0_0 = arith.constant 0 : index
    %c0_1 = arith.constant 0 : index
    %0 = vector.load %arg1[%c0, %c0_0, %c0_1] : memref<1x3x256xf32, #tpu.memory_space<vmem>>, vector<1x1x256xf32>
    %c0_2 = arith.constant 0 : index
    %c1 = arith.constant 1 : index
    %c0_3 = arith.constant 0 : index
    %1 = vector.load %arg1[%c0_2, %c1, %c0_3] : memref<1x3x256xf32, #tpu.memory_space<vmem>>, vector<1x1x256xf32>
    %c0_4 = arith.constant 0 : index
    %c2 = arith.constant 2 : index
    %c0_5 = arith.constant 0 : index
    %2 = vector.load %arg1[%c0_4, %c2, %c0_5] : memref<1x3x256xf32, #tpu.memory_space<vmem>>, vector<1x1x256xf32>
    %cst = arith.constant 2.990000e-01 : f32
    %3 = vector.broadcast %cst : f32 to vector<1x1x256xf32>
    %4 = arith.mulf %3, %0 : vector<1x1x256xf32>
    %cst_6 = arith.constant 5.870000e-01 : f32
    %5 = vector.broadcast %cst_6 : f32 to vector<1x1x256xf32>
    %6 = arith.mulf %5, %1 : vector<1x1x256xf32>
    %7 = arith.addf %4, %6 : vector<1x1x256xf32>
    %cst_7 = arith.constant 1.140000e-01 : f32
    %8 = vector.broadcast %cst_7 : f32 to vector<1x1x256xf32>
    %9 = arith.mulf %8, %2 : vector<1x1x256xf32>
    %10 = arith.addf %7, %9 : vector<1x1x256xf32>
    %c0_8 = arith.constant 0 : index
    %c0_9 = arith.constant 0 : index
    %c0_10 = arith.constant 0 : index
    %11 = vector.load %arg2[%c0_8, %c0_9, %c0_10] : memref<1x1x256xf32, #tpu.memory_space<vmem>>, vector<1x1x256xf32>
    tpu.vector_store %arg2[%c0_8, %c0_9, %c0_10], %10 {strides = array<i32>} : memref<1x1x256xf32, #tpu.memory_space<vmem>>, vector<1x1x256xf32>,
    return
  }
  func.func @transform_0(%arg0: i32) -> (i32, i32, i32) {
    %c0_i32 = arith.constant 0 : i32
    %c0_i32_0 = arith.constant 0 : i32
    %c0_i32_1 = arith.constant 0 : i32
    return %c0_i32, %c0_i32_0, %arg0 : i32, i32, i32
  }
  func.func @transform_1(%arg0: i32) -> (i32, i32, i32) {
    %c0_i32 = arith.constant 0 : i32
    %c0_i32_0 = arith.constant 0 : i32
    %c0_i32_1 = arith.constant 0 : i32
    return %c0_i32, %c0_i32_0, %arg0 : i32, i32, i32
  }
}

</mosaic_0001>

<llo_original>
// kernel: tpu_custom_call.1
$region0: #{tpu_custom_call.1}
  #allocation0 [shape = 'u32[]', space=smem, size = 0x4, offset = 0x4, fixed_abs, tag = 'smem constant byte address 0x4 - core index']
  #allocation1 [shape = 'u32[72,128]{1,0:T(1,128)}', space=vmem, size = 0x9000, scoped, tag = 'internal scratch']
  %s0 = inlined_call_operand.vmem [shape: f32[1,3,256], index: 0, kind: input, shape index: {}]
  %s1 = inlined_call_operand.hbm [shape: f32[1,1,256], index: 1, kind: output, shape index: {}]
  %s2 = sld [smem:[#allocation0]]
  $region14: #{tpu_custom_call.1} parent=0
    _
  %s4 = ssub.s32 1, %s2
  %s5 = scalar_select 0, %s4, %s2
  $region1: #{tpu_custom_call.1} parent=0
    #allocation2 [shape = 'u8[1024]{0}', space=vmem, size = 0x400, scoped, tag = 'output window, operand 0, single buffered']
    #allocation3 [shape = 's32[1]{0}', space=sflag, size = 0x4, scoped, tag = 'scoped memory for tpu_custom_call.1']
    %6 = vsyncpa [#allocation3], 0
    // Predicated region
    $region2: #{tpu_custom_call.1} parent=1 // pred_check
      _
    $region3: #{tpu_custom_call.1} parent=1 // pred_check_branch
      %8 = sbr.rel (0) target = $region5
    $region4: #{tpu_custom_call.1} parent=1 // pred_region
      _
    $region5: #{tpu_custom_call.1} parent=1 // pred_fallthru
      _
    %v9 = vld [vmem:[%s0] ss:$4 sm:$0x3]
    %s10 = scalar_lea.vmem %s0, 1
    %v11 = vld [vmem:[%s10] ss:$4 sm:$0x3]
    %s12 = scalar_lea.vmem %s0, 2
    %v13 = vld [vmem:[%s12] ss:$4 sm:$0x3]
    %v14 = vmul.f32 %v9, 0.299
    %v15 = vmul.f32 %v11, 0.587
    %v16 = vadd.f32 %v14, %v15
    %v17 = vmul.f32 %v13, 0.114
    %v18 = vadd.f32 %v16, %v17
    %v19 = vlaneseq
    %vm20 = vcmp.ge.s32.totalorder %v19, 0
    %vm21 = vcmp.lt.s32.totalorder %v19, 256
    %vm22 = vmand %vm20, %vm21
    %23 = vst.msk [vmem:[#allocation2] sm:$0x3] %vm22, %v18
    // Predicated region
    $region6: #{tpu_custom_call.1} parent=1 // pred_check
      _
    $region7: #{tpu_custom_call.1} parent=1 // pred_check_branch
      %25 = sbr.rel (0) target = $region9
    $region8: #{tpu_custom_call.1} parent=1 // pred_region
      %27 = vsyncadd [#allocation3], 0
      %s29 = sshll.u32 [#allocation2], 4
      %s30 = int_to_ptr.vmem [resolvable:$true] %s29
      %s31 = sshll.u32 %s1, 4
      %s32 = int_to_ptr.hbm [resolvable:$true] %s31
      %34 = dma.vmem_to_hbm [thread:$0]  %s30, 32, %s32, [#allocation3]
    $region9: #{tpu_custom_call.1} parent=1 // pred_fallthru
      _
    // Predicated region
    $region10: #{tpu_custom_call.1} parent=1 // pred_check
      _
    $region11: #{tpu_custom_call.1} parent=1 // pred_check_branch
      %36 = sbr.rel (0) target = $region13
    $region12: #{tpu_custom_call.1} parent=1 // pred_region
      %38 = dma.done [#allocation3], 32
    $region13: #{tpu_custom_call.1} parent=1 // pred_fallthru
      _
    %39 = vsyncpa [#allocation3], 1

</llo_original>
